<compile_context>
chip_gen: v6e
topology: v6e:2x2x1
jax: 0.10.0
libtpu: 0.0.40
codegen_flags: <defaults>
</compile_context>

<pallas_src>
import functools

import jax
import jax.numpy as jnp
from jax.experimental import pallas as pl
from jax.experimental.pallas import tpu as pltpu


def _diversity_kernel(x_ref, out_ref, *, eps):
    b = pl.program_id(0)

    @pl.when(b == 0)
    def _init():
        out_ref[0, 0] = jnp.float32(0.0)

    x = x_ref[0].astype(jnp.float32)                     # (K, D)

    # Row-wise L2 normalization == F.normalize(smry_mat, dim=1) in the original
    # (B, D, K) layout (each row here is one of the K summary vectors of length D).
    sq = jnp.sum(x * x, axis=1, keepdims=True)           # (K, 1)
    inv = 1.0 / jnp.maximum(jnp.sqrt(sq), eps)
    xn = x * inv                                         # (K, D)

    # Gram matrix G = Xn @ Xn^T, contracting the lane-dense D axis on the MXU
    # (rhs-contracting-dim-1 form; no explicit in-kernel transpose needed).
    g = jax.lax.dot_general(
        xn, xn,
        dimension_numbers=(((1,), (1,)), ((), ())),
        preferred_element_type=jnp.float32,
    )                                                    # (K, K)

    k = g.shape[0]
    row = jax.lax.broadcasted_iota(jnp.int32, (k, k), 0)
    col = jax.lax.broadcasted_iota(jnp.int32, (k, k), 1)
    diff = jnp.where(row == col, g - 1.0, g)             # G - I_K
    out_ref[0, 0] += jnp.sum(diff * diff)


def diversity_regularization(smry_mat, *, eps=1e-12):
    """Pallas TPU implementation of DiversityRegularization.forward(smry_mat)."""
    b, d, k = smry_mat.shape

    # Layout plumbing in the wrapper: put the feature (contraction) axis last so
    # the per-tile norm reduction and Gram matmul are lane-dense.
    x = jnp.swapaxes(smry_mat, 1, 2)                     # (B, K, D)

    kernel = functools.partial(_diversity_kernel, eps=float(eps))
    itemsize = jnp.dtype(smry_mat.dtype).itemsize
    cost = pl.CostEstimate(
        flops=int(b * (2 * k * k * d + 4 * k * d + 2 * k * k)),
        transcendentals=int(b * k),
        bytes_accessed=int(b * k * d * itemsize + 4),
    )

    out = pl.pallas_call(
        kernel,
        out_shape=jax.ShapeDtypeStruct((1, 1), jnp.float32),
        grid_spec=pltpu.PrefetchScalarGridSpec(
            num_scalar_prefetch=0,
            grid=(b,),
            in_specs=[pl.BlockSpec((1, k, d), lambda i: (i, 0, 0))],
            out_specs=pl.BlockSpec(memory_space=pltpu.SMEM),
        ),
        compiler_params=pltpu.CompilerParams(
            # Batch axis feeds the resident SMEM scalar accumulator -> reduction axis.
            dimension_semantics=("arbitrary",),
        ),
        cost_estimate=cost,
    )(x)
    return out[0, 0]


def diversity_regularization_ref(smry_mat, *, eps=1e-12):
    """Pure-JAX reference mirroring the PyTorch forward."""
    x = smry_mat.astype(jnp.float32)                     # (B, D, K)
    norm = jnp.sqrt(jnp.sum(x * x, axis=1, keepdims=True))
    xn = x / jnp.maximum(norm, eps)
    g = jnp.einsum("bdk,bdl->bkl", xn, xn)               # (B, K, K)
    eye = jnp.eye(x.shape[2], dtype=jnp.float32)
    diff = g - eye[None]
    return jnp.sum(diff * diff)


if __name__ == "__main__":
    key = jax.random.PRNGKey(0)
    B, D, K = 2, 32, 8                                   # batch_size=2, feature dim=32, smry_k=8
    smry_mat = jax.random.normal(key, (B, D, K), dtype=jnp.float32)

    loss = diversity_regularization(smry_mat)
    jax.block_until_ready(loss)

    ref = diversity_regularization_ref(smry_mat)
    assert jnp.allclose(loss, ref, rtol=1e-5, atol=1e-5), (loss, ref)

    print("KERNEL_OK")
</pallas_src>

<mosaic_0001>
module attributes {stable_mosaic.version = 11 : i64} {
  func.func @_diversity_kernel(%arg0: i32, %arg1: memref<1x8x32xf32, #tpu.memory_space<vmem>>, %arg2: memref<1x1xf32, #tpu.memory_space<smem>>) attributes {dimension_semantics = [#tpu.dimension_semantics<arbitrary>], iteration_bounds = array<i64: 2>, scalar_prefetch = 0 : i64, scratch_operands = 0 : i64, tpu.core_type = #tpu.core_type<tc>, window_params = [{transform_indices = @transform_0, window_bounds = array<i64: 1, 8, 32>}, {transform_indices = @transform_1, window_bounds = array<i64: 1, 1>}]} {
    %c0_i32 = arith.constant 0 : i32
    %0 = arith.cmpi eq, %arg0, %c0_i32 : i32
    %1 = arith.extui %0 : i1 to i32
    %c0_i32_0 = arith.constant 0 : i32
    %2 = arith.cmpi ne, %1, %c0_i32_0 : i32
    scf.if %2 {
      %cst_12 = arith.constant 0.000000e+00 : f32
      %c0_13 = arith.constant 0 : index
      %c0_14 = arith.constant 0 : index
      %30 = memref.load %arg2[%c0_13, %c0_14] : memref<1x1xf32, #tpu.memory_space<smem>>
      memref.store %cst_12, %arg2[%c0_13, %c0_14] : memref<1x1xf32, #tpu.memory_space<smem>>
    } else {
    }
    %c0 = arith.constant 0 : index
    %c0_1 = arith.constant 0 : index
    %c0_2 = arith.constant 0 : index
    %3 = vector.load %arg1[%c0, %c0_1, %c0_2] : memref<1x8x32xf32, #tpu.memory_space<vmem>>, vector<1x8x32xf32>
    %4 = vector.shape_cast %3 : vector<1x8x32xf32> to vector<8x32xf32>
    %5 = arith.mulf %4, %4 : vector<8x32xf32>
    %cst = arith.constant dense<0.000000e+00> : vector<8xf32>
    %6 = vector.multi_reduction <add>, %5, %cst [1] : vector<8x32xf32> to vector<8xf32>
    %7 = vector.shape_cast %6 : vector<8xf32> to vector<8x1xf32>
    %8 = math.sqrt %7 : vector<8x1xf32>
    %cst_3 = arith.constant 9.99999996E-13 : f32
    %9 = vector.broadcast %cst_3 : f32 to vector<8x1xf32>
    %10 = arith.maximumf %8, %9 : vector<8x1xf32>
    %cst_4 = arith.constant 1.000000e+00 : f32
    %11 = vector.broadcast %cst_4 : f32 to vector<8x1xf32>
    %12 = arith.divf %11, %10 : vector<8x1xf32>
    %13 = vector.broadcast %12 : vector<8x1xf32> to vector<8x32xf32>
    %14 = arith.mulf %4, %13 : vector<8x32xf32>
    %cst_5 = arith.constant dense<0.000000e+00> : vector<8x8xf32>
    %15 = tpu.matmul %14, %14, %cst_5 {dimension_numbers = #tpu.dot_dimension_numbers<[1], [1], [0], [0], [0, 0, 1, 0], [], []>} : vector<8x32xf32>, vector<8x32xf32>, vector<8x8xf32> -> vector<8x8xf32>
    %16 = tpu.iota {dimensions = array<i32: 0>} : vector<8x8xi32>
    %17 = tpu.iota {dimensions = array<i32: 1>} : vector<8x8xi32>
    %18 = arith.cmpi eq, %16, %17 : vector<8x8xi32>
    %cst_6 = arith.constant 1.000000e+00 : f32
    %19 = vector.broadcast %cst_6 : f32 to vector<8x8xf32>
    %20 = arith.subf %15, %19 : vector<8x8xf32>
    %21 = arith.select %18, %20, %15 : vector<8x8xi1>, vector<8x8xf32>
    %c0_7 = arith.constant 0 : index
    %c0_8 = arith.constant 0 : index
    %22 = memref.load %arg2[%c0_7, %c0_8] : memref<1x1xf32, #tpu.memory_space<smem>>
    %23 = arith.mulf %21, %21 : vector<8x8xf32>
    %24 = vector.shape_cast %23 : vector<8x8xf32> to vector<1x8x8xf32>
    %cst_9 = arith.constant dense<0.000000e+00> : vector<1xf32>
    %25 = vector.multi_reduction <add>, %24, %cst_9 [1, 2] : vector<1x8x8xf32> to vector<1xf32>
    %26 = vector.shape_cast %25 : vector<1xf32> to vector<1x1x1xf32>
    %27 = vector.extract %26[0, 0, 0] : f32 from vector<1x1x1xf32>
    %28 = arith.addf %22, %27 : f32
    %c0_10 = arith.constant 0 : index
    %c0_11 = arith.constant 0 : index
    %29 = memref.load %arg2[%c0_10, %c0_11] : memref<1x1xf32, #tpu.memory_space<smem>>
    memref.store %28, %arg2[%c0_10, %c0_11] : memref<1x1xf32, #tpu.memory_space<smem>>
    return
  }
  func.func @transform_0(%arg0: i32) -> (i32, i32, i32) {
    %c0_i32 = arith.constant 0 : i32
    %c0_i32_0 = arith.constant 0 : i32
    %c0_i32_1 = arith.constant 0 : i32
    return %arg0, %c0_i32, %c0_i32_0 : i32, i32, i32
  }
  func.func @transform_1(%arg0: i32) -> (i32, i32) {
    %c0_i32 = arith.constant 0 : i32
    %c0_i32_0 = arith.constant 0 : i32
    %c0_i32_1 = arith.constant 0 : i32
    return %c0_i32, %c0_i32_0 : i32, i32
  }
}

</mosaic_0001>

<llo_original>
// kernel: tpu_custom_call.1
$region0: #{tpu_custom_call.1}
  #allocation0 [shape = 'u32[]', space=smem, size = 0x4, offset = 0x4, fixed_abs, tag = 'smem constant byte address 0x4 - core index']
  #allocation1 [shape = 'u32[144,128]{1,0:T(1,128)}', space=vmem, size = 0x12000, scoped, tag = 'internal scratch']
  %s0 = inlined_call_operand.hbm [shape: f32[2,8,32], index: 0, kind: input, shape index: {}]
  %s1 = inlined_call_operand.hbm [shape: f32[1,1], index: 1, kind: output, shape index: {}]
  %s2 = sld [smem:[#allocation0]]
  $region45: #{tpu_custom_call.1} parent=0
    _
  %s4 = ssub.s32 1, %s2
  %s5 = scalar_select 0, %s4, %s2
  $region1: #{tpu_custom_call.1} parent=0
    #allocation2 [shape = 'u8[8192]{0}', space=vmem, size = 0x2000, scoped, tag = 'input window, operand 0']
    #allocation3 [shape = 's32[2]{0}', space=sflag, size = 0x8, scoped, tag = 'scoped memory for tpu_custom_call.1']
    #allocation4 [shape = 's32[2]{0}', space=sflag, size = 0x8, scoped, tag = 'scoped memory for tpu_custom_call.1']
    #allocation5 [shape = 'u8[512]{0}', space=smem, size = 0x200, scoped, tag = 'output window, operand 0, single buffered']
    %6 = vsyncpa [#allocation3], 0
    %s7 = scalar_lea.sflag [#allocation3], 1
    %8 = vsyncpa %s7, 0
    %9 = vsyncpa [#allocation4], 0
    loop: start=0, step=1, limit=4
    $region2: #{tpu_custom_call.1} parent=1 // loop_pre_header
      _
    $region3: #{tpu_custom_call.1} parent=1 // loop_header
      %s11 = sphi 0, %s15
      %p12 = scmp.ge.s32.totalorder %s11, 4
      %s21 = sphi 0, %s23
      %s24 = sphi 0, %s21
      %s25 = sphi 0, %s24
      %s41 = sphi 0, %s25
      %s45 = sphi 0, %s45
      %s47 = sphi 0, %s45
      %s48 = sphi 0, %s47
      %s62 = sphi 0, %s48
    $region4: #{tpu_custom_call.1} parent=1 // loop_header_branch
      %14 = sbr.rel (%p12) target = $region8
    $region5: #{tpu_custom_call.1} parent=1 // loop_body
      %s16 = ssub.s32 %s11, 1
      %s17 = ssub.s32 %s11, 2
      %s18 = sadd.s32 %s11, 1
      %s19 = ssub.s32 %s11, %s18
      %p20 = scmp.eq.s32.totalorder %s19, 0
      %s22 = sadd.s32 %s21, 1
      %s23 = scalar_select %p20, %s21, %s22
      %p26 = pneg %p20
      %p27 = scmp.eq.s32.totalorder %s11, 1
      %p28 = por %p26, %p27
      %p29 = scmp.ne.s32.totalorder %s21, %s24
      %p30 = scmp.eq.s32.totalorder %s11, 0
      %p31 = por %p29, %p30
      %p32 = scmp.ne.s32.totalorder %s21, %s24
      %p33 = scmp.eq.s32.totalorder %s16, 1
      %p34 = por %p32, %p33
      %p35 = scmp.ne.s32.totalorder %s24, %s25
      %p36 = scmp.eq.s32.totalorder %s16, 0
      %p37 = por %p35, %p36
      %p38 = scmp.ne.s32.totalorder %s24, %s25
      %p39 = scmp.eq.s32.totalorder %s17, 1
      %p40 = por %p38, %p39
      %p42 = scmp.ne.s32.totalorder %s25, %s41
      %p43 = scmp.eq.s32.totalorder %s17, 0
      %p44 = por %p42, %p43
      %s46 = sadd.s32 %s45, 1
      %p49 = scmp.eq.s32.totalorder %s11, 1
      %p50 = scmp.ne.s32.totalorder %s45, %s47
      %p51 = scmp.eq.s32.totalorder %s11, 0
      %p52 = por %p50, %p51
      %p53 = scmp.ne.s32.totalorder %s45, %s47
      %p54 = scmp.eq.s32.totalorder %s16, 1
      %p55 = por %p53, %p54
      %p56 = scmp.ne.s32.totalorder %s47, %s48
      %p57 = scmp.eq.s32.totalorder %s16, 0
      %p58 = por %p56, %p57
      %p59 = scmp.ne.s32.totalorder %s47, %s48
      %p60 = scmp.eq.s32.totalorder %s17, 1
      %p61 = por %p59, %p60
      %p63 = scmp.ne.s32.totalorder %s48, %s62
      %p64 = scmp.eq.s32.totalorder %s17, 0
      %p65 = por %p63, %p64
      %p66 = scmp.le.s32.totalorder 1, %s11
      %p67 = scmp.lt.s32.totalorder %s11, 3
      %p68 = pnand %p66, %p67
      %p69 = pneg %p68
      // Predicated region
      $region9: #{tpu_custom_call.1} parent=5 // pred_check
        _
      $region10: #{tpu_custom_call.1} parent=5 // pred_check_branch
        %71 = sbr.rel (%p68) target = $region12
      $region11: #{tpu_custom_call.1} parent=5 // pred_region
        %s72 = ssub.s32 %s11, 1
      $region12: #{tpu_custom_call.1} parent=5 // pred_fallthru
        _
      %p73 = scmp.lt.s32.totalorder %s11, 2
      // Predicated region
      $region13: #{tpu_custom_call.1} parent=5 // pred_check
        %p74 = pneg %p73
      $region14: #{tpu_custom_call.1} parent=5 // pred_check_branch
        %76 = sbr.rel (%p74) target = $region16
      $region15: #{tpu_custom_call.1} parent=5 // pred_region
        // Predicated region
        $region17: #{tpu_custom_call.1} parent=15 // pred_check
          %p77 = pneg %p31
        $region18: #{tpu_custom_call.1} parent=15 // pred_check_branch
          %79 = sbr.rel (%p77) target = $region20
        $region19: #{tpu_custom_call.1} parent=15 // pred_region
          %s80 = sand.u32 %s21, 1
          %s81 = scalar_lea.sflag [#allocation3], %s80
          %s82 = sand.u32 %s21, 1
          %s83 = smul.addr %s82, 8
          %s84 = scalar_lea.vmem [#allocation2], %s83
          %s86 = ssub.s32 128, 128
          %87 = vsyncadd %s81, %s86
          %s88 = smul.addr %s11, 128
          %s89 = scalar_lea.hbm %s0, %s88
          %s91 = sshll.u32 %s84, 4
          %s92 = int_to_ptr.vmem [resolvable:$true] %s91
          %94 = dma.hbm_to_vmem [thread:$0]  %s89, 128, %s92, %s81
        $region20: #{tpu_custom_call.1} parent=15 // pred_fallthru
          _
      $region16: #{tpu_custom_call.1} parent=5 // pred_fallthru
        _
      %p95 = scmp.le.s32.totalorder 1, %s11
      %p96 = scmp.lt.s32.totalorder %s11, 3
      %p97 = pnand %p95, %p96
      %p98 = pneg %p97
      // Predicated region
      $region21: #{tpu_custom_call.1} parent=5 // pred_check
        _
      $region22: #{tpu_custom_call.1} parent=5 // pred_check_branch
        %100 = sbr.rel (%p97) target = $region24
      $region23: #{tpu_custom_call.1} parent=5 // pred_region
        %s101 = ssub.s32 %s11, 1
        %s102 = sand.u32 %s24, 1
        %s103 = scalar_lea.sflag [#allocation3], %s102
        %s104 = sand.u32 %s24, 1
        %s105 = smul.addr %s104, 8
        %s106 = scalar_lea.vmem [#allocation2], %s105
        // Predicated region
        $region25: #{tpu_custom_call.1} parent=23 // pred_check
          %p107 = pneg %p37
        $region26: #{tpu_custom_call.1} parent=23 // pred_check_branch
          %109 = sbr.rel (%p107) target = $region28
        $region27: #{tpu_custom_call.1} parent=23 // pred_region
          %110 = dma.done %s103, 128
        $region28: #{tpu_custom_call.1} parent=23 // pred_fallthru
          _
        %s111 = sand.u32 %s24, 1
        %s112 = scalar_lea.sflag [#allocation3], %s111
        %s113 = sand.u32 %s24, 1
        %s114 = smul.addr %s113, 8
        %s115 = scalar_lea.vmem [#allocation2], %s114
        %p116 = pneg %p37
        %p117 = pneg %p34
        %p118 = pneg %p58
        %p119 = pneg %p55
        %p120 = scmp.eq.s32.totalorder %s16, 0
        // Predicated region
        $region29: #{tpu_custom_call.1} parent=23 // pred_check
          %p121 = pneg %p120
        $region30: #{tpu_custom_call.1} parent=23 // pred_check_branch
          %123 = sbr.rel (%p121) target = $region32
        $region31: #{tpu_custom_call.1} parent=23 // pred_region
          %s124 = scalar_lea.smem [#allocation5], 0
          %125 = sst [smem:[%s124]] 0.0
        $region32: #{tpu_custom_call.1} parent=23 // pred_fallthru
          _
        %v126 = vld [vmem:[%s106] sm:$0xff]
        %v127 = vmul.f32 %v126, %v126
        %vm128 = vcmask 261120
        %v129 = vsel %vm128, %v127, 0.0
        %130 = vadd.xlane.f32.xlu0 %v129
        %v131 = vpop.xlane.xlu0 %130
        %v132 = vrsqrt.pop %v131
        %v133 = vmul.f32 %v131, %v132
        %vm134 = vcmp.eq.f32.partialorder %v131, inf
        %v135 = vsel %vm134, %v131, %v133
        %vm136 = vcmp.eq.f32.partialorder %v131, 0.0
        %v137 = vand.u32 %v131, 2147483648
        %v138 = vsel %vm136, %v137, %v135
        %v139 = vmax.f32 %v138, 1e-12
        %v140 = vrcp.pop %v139
        %v141 = vmul.f32 1.0, %v140
        %v142 = vmul.f32 %v126, %v141
        %v144 = vsel %vm128, %v142, 0
        %146 = vmatprep.subr.mxu0 0.0
        %147 = vmatpush1.xpose.msra.mxu0 0.0
        %148 = vmatprep.subr.mxu0 0.0
        %149 = vmatpush1.xpose.msra.mxu0 0.0
        %150 = vmatprep.subr.mxu0 0.0
        %151 = vmatpush1.xpose.msra.mxu0 0.0
        %152 = vmatprep.subr.mxu0 0.0
        %153 = vmatpush1.xpose.msra.mxu0 0.0
        %154 = vmatprep.subr.mxu0 0.0
        %155 = vmatpush1.xpose.msra.mxu0 0.0
        %156 = vmatprep.subr.mxu0 0.0
        %157 = vmatpush1.xpose.msra.mxu0 0.0
        %158 = vmatprep.subr.mxu0 0.0
        %159 = vmatpush1.xpose.msra.mxu0 0.0
        %160 = vmatprep.subr.mxu0 0.0
        %161 = vmatpush1.xpose.msra.mxu0 0.0
        %162 = vmatprep.subr.mxu0 0.0
        %163 = vmatpush1.xpose.msra.mxu0 0.0
        %164 = vmatprep.subr.mxu0 0.0
        %165 = vmatpush1.xpose.msra.mxu0 0.0
        %166 = vmatprep.subr.mxu0 0.0
        %167 = vmatpush1.xpose.msra.mxu0 0.0
        %168 = vmatprep.subr.mxu0 0.0
        %169 = vmatpush1.xpose.msra.mxu0 0.0
        %170 = vmatprep.subr.mxu0 0.0
        %171 = vmatpush1.xpose.msra.mxu0 0.0
        %172 = vmatprep.subr.mxu0 0.0
        %173 = vmatpush1.xpose.msra.mxu0 0.0
        %174 = vmatprep.subr.mxu0 0.0
        %175 = vmatpush1.xpose.msra.mxu0 0.0
        %176 = vmatprep.subr.mxu0 0.0
        %177 = vmatpush1.xpose.msra.mxu0 %v144
        %178 = vmatprep.subr.mxu0 0.0
        %179 = vmatpush2.xpose.msra.mxu0 0.0
        %180 = vmatprep.subr.mxu0 0.0
        %181 = vmatpush2.xpose.msra.mxu0 0.0
        %182 = vmatprep.subr.mxu0 0.0
        %183 = vmatpush2.xpose.msra.mxu0 0.0
        %184 = vmatprep.subr.mxu0 0.0
        %185 = vmatpush2.xpose.msra.mxu0 0.0
        %186 = vmatprep.subr.mxu0 0.0
        %187 = vmatpush2.xpose.msra.mxu0 0.0
        %188 = vmatprep.subr.mxu0 0.0
        %189 = vmatpush2.xpose.msra.mxu0 0.0
        %190 = vmatprep.subr.mxu0 0.0
        %191 = vmatpush2.xpose.msra.mxu0 0.0
        %192 = vmatprep.subr.mxu0 0.0
        %193 = vmatpush2.xpose.msra.mxu0 0.0
        %194 = vmatprep.subr.mxu0 0.0
        %195 = vmatpush2.xpose.msra.mxu0 0.0
        %196 = vmatprep.subr.mxu0 0.0
        %197 = vmatpush2.xpose.msra.mxu0 0.0
        %198 = vmatprep.subr.mxu0 0.0
        %199 = vmatpush2.xpose.msra.mxu0 0.0
        %200 = vmatprep.subr.mxu0 0.0
        %201 = vmatpush2.xpose.msra.mxu0 0.0
        %202 = vmatprep.subr.mxu0 0.0
        %203 = vmatpush2.xpose.msra.mxu0 0.0
        %204 = vmatprep.subr.mxu0 0.0
        %205 = vmatpush2.xpose.msra.mxu0 0.0
        %206 = vmatprep.subr.mxu0 0.0
        %207 = vmatpush2.xpose.msra.mxu0 0.0
        %208 = vmatprep.subr.mxu0 0.0
        %209 = vmatpush2.xpose.msra.mxu0 0.0
        %210 = vmatprep.mubr.f32.mxu0 0.0
        %211 = vmatmul.mubr.f32.gmra.mxu0 %v144
        %v212 = vpop.f32.mrf.mxu0
        %v213 = vadd.f32 0.0, %v212
        %v214 = vpop.f32.mrf.mxu0
        %215 = vdwg.mxu0
        %v216 = vlaneseq
        %v217 = vshrl.u32 %v216, 7
        %v218 = vlaneseq
        %v219 = vand.u32 %v218, 127
        %vm220 = vcmp.eq.s32.totalorder %v217, %v219
        %v221 = vsub.f32 %v213, 1.0
        %v222 = vsel %vm220, %v221, %v213
        %s223 = sld [smem:[#allocation5]]
        %v224 = vmul.f32 %v222, %v222
        %vm225 = vcmask 64512
        %v226 = vsel %vm225, %v224, 0.0
        %227 = vadd.xlane.f32.xlu0 %v226
        %v228 = vpop.xlane.xlu0 %227
        %v229 = vrot.slane %v228, 4
        %v230 = vadd.f32 %v228, %v229
        %v231 = vrot.slane %v230, 2
        %v232 = vadd.f32 %v230, %v231
        %v233 = vrot.slane %v232, 1
        %v234 = vadd.f32 %v232, %v233
        %s235 = vtos %v234
        %s236 = sadd.f32 %s223, %s235
        %s237 = scalar_lea.smem [#allocation5], 0
        %238 = sst [smem:[%s237]] %s236
        // Predicated region
        $region33: #{tpu_custom_call.1} parent=23 // pred_check
          %p239 = pneg %p55
        $region34: #{tpu_custom_call.1} parent=23 // pred_check_branch
          %241 = sbr.rel (%p239) target = $region36
        $region35: #{tpu_custom_call.1} parent=23 // pred_region
          %s243 = ssub.s32 16, 16
          %244 = vsyncadd [#allocation4], %s243
          %247 = dma.smem_to_hbm [#allocation5], 16, %s1, [#allocation4]
        $region36: #{tpu_custom_call.1} parent=23 // pred_fallthru
          _
        // Predicated region
        $region37: #{tpu_custom_call.1} parent=23 // pred_check
          %p248 = pneg %p55
        $region38: #{tpu_custom_call.1} parent=23 // pred_check_branch
          %250 = sbr.rel (%p248) target = $region40
        $region39: #{tpu_custom_call.1} parent=23 // pred_region
          %251 = dma.done [#allocation4], 16
        $region40: #{tpu_custom_call.1} parent=23 // pred_fallthru
          _
        %252 = sfence
      $region24: #{tpu_custom_call.1} parent=5 // pred_fallthru
        _
      %p253 = scmp.le.s32.totalorder 2, %s11
      // Predicated region
      $region41: #{tpu_custom_call.1} parent=5 // pred_check
        %p254 = pneg %p253
      $region42: #{tpu_custom_call.1} parent=5 // pred_check_branch
        %256 = sbr.rel (%p254) target = $region44
      $region43: #{tpu_custom_call.1} parent=5 // pred_region
        %s257 = ssub.s32 %s11, 2
      $region44: #{tpu_custom_call.1} parent=5 // pred_fallthru
        _
    $region6: #{tpu_custom_call.1} parent=1 // loop_footer
      %s15 = sadd.s32 1, %s11
    $region7: #{tpu_custom_call.1} parent=1 // loop_footer_branch
      %10 = sbr.rel target = $region3
    $region8: #{tpu_custom_call.1} parent=1 // loop_exit
      _
    %258 = vsyncpa [#allocation3], 1
    %s259 = scalar_lea.sflag [#allocation3], 1
    %260 = vsyncpa %s259, 1
    %261 = vsyncpa [#allocation4], 1
    %s262 = scalar_lea.sflag [#allocation4], 1
    %263 = vsyncpa %s262, 1

</llo_original>
